<compile_context>
chip_gen: v7x
topology: tpu7x:2x2x1
jax: 0.10.0
libtpu: 0.0.40
codegen_flags: <defaults>
</compile_context>

<pallas_src>
import functools

import jax
import jax.numpy as jnp
from jax.experimental import pallas as pl
from jax.experimental.pallas import tpu as pltpu

_LANE = 128
_MAX_LANE_GROUPS = 16          # caps the static per-step unroll (tl <= 2048)


def _global_pool_kernel(x_ref, avg_ref, max_ref, sum_sc, max_sc, *,
                        inv_hw, lane_groups, total_l, needs_mask):
    """One (row-tile, spatial-tile) step of the fused global sum+max reduction.

    x_ref:            (TM, TL) block of the (N*C, H*W) view.
    avg_ref/max_ref:  (TM, 1) mean / max over H*W (written on last spatial step).
    sum_sc/max_sc:    (TM, 128) f32 lane-dense partials when lane_groups > 0,
                      else (TM, 1).
    """
    li = pl.program_id(1)
    tl = x_ref.shape[1]

    # NOTE: compute in f32 (matches torch float pooling); integer inputs are
    # computed via f32 like the previous version (exactness lost above 2^24).
    xf = x_ref[...].astype(jnp.float32)

    if needs_mask:
        # Last spatial tile may extend past H*W: neutralize padded lanes.
        col = jax.lax.broadcasted_iota(jnp.int32, xf.shape, 1) + li * tl
        valid = col < total_l
        xs = jnp.where(valid, xf, 0.0)
        xm = jnp.where(valid, xf, -jnp.inf)
    else:
        xs = xf
        xm = xf

    if lane_groups > 0:
        # Combine 128-wide lane groups elementwise: pure VPU work (same
        # lane/sublane positions, different vregs). No per-step XLU reduce.
        part_s = xs[:, 0:_LANE]
        part_m = xm[:, 0:_LANE]
        for g in range(1, lane_groups):
            sl = slice(g * _LANE, (g + 1) * _LANE)
            part_s = part_s + xs[:, sl]
            part_m = jnp.maximum(part_m, xm[:, sl])
    else:
        # tl == H*W (single spatial step) and not 128-aligned: reduce directly.
        part_s = jnp.sum(xs, axis=-1, keepdims=True)
        part_m = jnp.max(xm, axis=-1, keepdims=True)

    @pl.when(li == 0)
    def _():
        sum_sc[...] = part_s
        max_sc[...] = part_m

    @pl.when(li > 0)
    def _():
        sum_sc[...] = sum_sc[...] + part_s
        max_sc[...] = jnp.maximum(max_sc[...], part_m)

    @pl.when(li == pl.num_programs(1) - 1)
    def _():
        # Single XLU cross-lane fold per row tile (not per spatial step).
        avg_ref[...] = (jnp.sum(sum_sc[...], axis=-1, keepdims=True)
                        * inv_hw).astype(avg_ref.dtype)
        max_ref[...] = jnp.max(max_sc[...], axis=-1,
                               keepdims=True).astype(max_ref.dtype)


def _cdiv(a, b):
    return -(-a // b)


def _ceil_mult(x, m):
    return _cdiv(x, m) * m


def _largest_aligned_divisor(n, unit, cap):
    """Largest multiple-of-`unit` divisor of n that is <= cap, else 0."""
    best = 0
    d = unit
    while d <= min(n, cap):
        if n % d == 0:
            best = d
        d += unit
    return best


def _vmem_limit_bytes():
    try:
        vmem_phys = int(pltpu.get_tpu_info().vmem_capacity_bytes)
    except Exception:
        vmem_phys = 64 * 1024 * 1024   # conservative: v7x per-TC VMEM
    # Keep the kernel's scoped VMEM well under physical on every generation
    # (v5e/v6e: 128 MiB -> 48 MiB; v7x: 64 MiB -> 32 MiB).
    return min(vmem_phys // 2, 48 * 1024 * 1024)


def _global_avg_max(x):
    """Global avg & max over spatial dims of NCHW x; returns two (N, C) arrays."""
    n, c, h, w = x.shape
    r, l = n * c, h * w
    xf = x.reshape(r, l)                          # lane-dense view (free for NCHW)

    itemsize = jnp.dtype(x.dtype).itemsize
    su = max(8, 32 // itemsize)                   # sublane tile: 8 f32 / 16 bf16 / 32 i8
    vmem_limit = _vmem_limit_bytes()
    block_cap = min(8 * 1024 * 1024, vmem_limit // 4)   # target input-block bytes

    # --- spatial (lane / reduction) tile --------------------------------------
    if l <= _MAX_LANE_GROUPS * _LANE and l * su * itemsize <= block_cap:
        tl, needs_mask = l, False                 # whole H*W in one spatial step
    else:
        tl = _largest_aligned_divisor(l, _LANE, _MAX_LANE_GROUPS * _LANE)
        if tl == 0:
            tl = _MAX_LANE_GROUPS * _LANE         # cdiv grid + in-kernel masking
        needs_mask = (l % tl) != 0
    lane_groups = (tl // _LANE) if (tl % _LANE == 0) else 0
    acc_w = _LANE if lane_groups > 0 else 1

    # --- row (sublane / parallel) tile: fill the VMEM byte budget -------------
    tm_full = _ceil_mult(r, su)
    per_row = 2 * tl * itemsize + 2 * acc_w * 4   # dbl-buffered input + f32 scratch
    usable = max(per_row * su, vmem_limit - 4 * 1024 * 1024)
    tm_cap_vmem = max(su, (usable // per_row) // su * su)
    tm_cap_blk = max(su, (block_cap // (tl * itemsize)) // su * su)
    tm = min(tm_full, tm_cap_vmem, tm_cap_blk)

    # v7x megacore: keep >= 2 tiles on the "parallel" row axis when possible.
    if _cdiv(r, tm) < 2 and r > su:
        tm = _ceil_mult(_cdiv(r, 2), su)

    grid = (_cdiv(r, tm), _cdiv(l, tl))
    kernel = functools.partial(
        _global_pool_kernel,
        inv_hw=1.0 / float(l),
        lane_groups=lane_groups,
        total_l=l,
        needs_mask=needs_mask,
    )

    avg, mx = pl.pallas_call(
        kernel,
        out_shape=(
            jax.ShapeDtypeStruct((r, 1), x.dtype),
            jax.ShapeDtypeStruct((r, 1), x.dtype),
        ),
        grid_spec=pltpu.PrefetchScalarGridSpec(
            num_scalar_prefetch=0,
            grid=grid,
            in_specs=[pl.BlockSpec((tm, tl), lambda i, j: (i, j))],
            out_specs=[
                pl.BlockSpec((tm, 1), lambda i, j: (i, 0)),
                pl.BlockSpec((tm, 1), lambda i, j: (i, 0)),
            ],
            scratch_shapes=[
                pltpu.VMEM((tm, acc_w), jnp.float32),
                pltpu.VMEM((tm, acc_w), jnp.float32),
            ],
        ),
        compiler_params=pltpu.CompilerParams(
            dimension_semantics=("parallel", "arbitrary"),
            vmem_limit_bytes=vmem_limit,
        ),
    )(xf)
    return avg.reshape(n, c), mx.reshape(n, c)


def select_adaptive_pool2d(x, pool_type="avg", flatten=False, output_size=1):
    """Pallas implementation of SelectAdaptivePool2d.forward (NCHW input)."""
    if pool_type == "":
        return x.reshape(x.shape[0], -1) if flatten else x

    if output_size != 1:
        # TODO(synk): general adaptive pooling (output_size != 1) not implemented;
        # the module's default and typical use is global pooling (output_size=1).
        raise NotImplementedError("only output_size=1 (global pooling) is supported")

    avg, mx = _global_avg_max(x)                  # (N, C) each

    if pool_type == "avg":
        out = avg
    elif pool_type == "max":
        out = mx
    elif pool_type == "avgmax":
        out = (0.5 * (avg.astype(jnp.float32) + mx.astype(jnp.float32))).astype(x.dtype)
    elif pool_type == "catavgmax":
        out = jnp.concatenate([avg, mx], axis=1)  # channel concat -> (N, 2C)
    else:
        raise AssertionError("Invalid pool type: %s" % pool_type)

    if flatten:
        return out                                # (N, C) or (N, 2C)
    return out[:, :, None, None]                  # (N, C, 1, 1) / (N, 2C, 1, 1)


if __name__ == "__main__":
    key = jax.random.PRNGKey(0)
    x = jax.random.normal(key, (2, 4, 16, 16), dtype=jnp.float32)

    # References (same semantics as F.adaptive_{avg,max}_pool2d with output_size=1).
    ref_avg = jnp.mean(x, axis=(2, 3), keepdims=True)
    ref_max = jnp.max(x, axis=(2, 3), keepdims=True)

    out_avg = select_adaptive_pool2d(x, pool_type="avg")
    out_max = select_adaptive_pool2d(x, pool_type="max")
    out_avgmax = select_adaptive_pool2d(x, pool_type="avgmax")
    out_cat = select_adaptive_pool2d(x, pool_type="catavgmax", flatten=True)
    out_id = select_adaptive_pool2d(x, pool_type="")
    jax.block_until_ready((out_avg, out_max, out_avgmax, out_cat, out_id))

    assert out_avg.shape == (2, 4, 1, 1)
    assert jnp.allclose(out_avg, ref_avg, atol=1e-5, rtol=1e-5)

    assert out_max.shape == (2, 4, 1, 1)
    assert jnp.allclose(out_max, ref_max, atol=1e-5, rtol=1e-5)

    assert out_avgmax.shape == (2, 4, 1, 1)
    assert jnp.allclose(out_avgmax, 0.5 * (ref_avg + ref_max), atol=1e-5, rtol=1e-5)

    ref_cat = jnp.concatenate([ref_avg, ref_max], axis=1).reshape(2, -1)
    assert out_cat.shape == (2, 8)
    assert jnp.allclose(out_cat, ref_cat, atol=1e-5, rtol=1e-5)

    assert jnp.array_equal(out_id, x)

    print("KERNEL_OK")
</pallas_src>

<mosaic_0001>
module attributes {stable_mosaic.version = 11 : i64} {
  func.func @_global_pool_kernel(%arg0: i32, %arg1: i32, %arg2: memref<8x256xf32, #tpu.memory_space<vmem>>, %arg3: memref<8x1xf32, #tpu.memory_space<vmem>>, %arg4: memref<8x1xf32, #tpu.memory_space<vmem>>, %arg5: memref<8x128xf32, #tpu.memory_space<vmem>>, %arg6: memref<8x128xf32, #tpu.memory_space<vmem>>) attributes {dimension_semantics = [#tpu.dimension_semantics<parallel>, #tpu.dimension_semantics<arbitrary>], iteration_bounds = array<i64: 1, 1>, scalar_prefetch = 0 : i64, scratch_operands = 2 : i64, tpu.core_type = #tpu.core_type<tc>, window_params = [{transform_indices = @transform_0, window_bounds = array<i64: 8, 256>}, {transform_indices = @transform_1, window_bounds = array<i64: 8, 1>}, {transform_indices = @transform_2, window_bounds = array<i64: 8, 1>}]} {
    %c0 = arith.constant 0 : index
    %c0_0 = arith.constant 0 : index
    %0 = vector.load %arg2[%c0, %c0_0] : memref<8x256xf32, #tpu.memory_space<vmem>>, vector<8x256xf32>
    %1 = vector.extract_strided_slice %0 {offsets = [0, 0], sizes = [8, 128], strides = [1, 1]} : vector<8x256xf32> to vector<8x128xf32>
    %2 = vector.extract_strided_slice %0 {offsets = [0, 0], sizes = [8, 128], strides = [1, 1]} : vector<8x256xf32> to vector<8x128xf32>
    %3 = vector.extract_strided_slice %0 {offsets = [0, 128], sizes = [8, 128], strides = [1, 1]} : vector<8x256xf32> to vector<8x128xf32>
    %4 = arith.addf %1, %3 : vector<8x128xf32>
    %5 = vector.extract_strided_slice %0 {offsets = [0, 128], sizes = [8, 128], strides = [1, 1]} : vector<8x256xf32> to vector<8x128xf32>
    %6 = arith.maximumf %2, %5 : vector<8x128xf32>
    %c0_i32 = arith.constant 0 : i32
    %7 = arith.cmpi eq, %arg1, %c0_i32 : i32
    %8 = arith.extui %7 : i1 to i32
    %c0_i32_1 = arith.constant 0 : i32
    %9 = arith.cmpi ne, %8, %c0_i32_1 : i32
    scf.if %9 {
      %c0_6 = arith.constant 0 : index
      %c0_7 = arith.constant 0 : index
      %16 = vector.load %arg5[%c0_6, %c0_7] : memref<8x128xf32, #tpu.memory_space<vmem>>, vector<8x128xf32>
      tpu.vector_store %arg5[%c0_6, %c0_7], %4 {strides = array<i32>} : memref<8x128xf32, #tpu.memory_space<vmem>>, vector<8x128xf32>,
      %c0_8 = arith.constant 0 : index
      %c0_9 = arith.constant 0 : index
      %17 = vector.load %arg6[%c0_8, %c0_9] : memref<8x128xf32, #tpu.memory_space<vmem>>, vector<8x128xf32>
      tpu.vector_store %arg6[%c0_8, %c0_9], %6 {strides = array<i32>} : memref<8x128xf32, #tpu.memory_space<vmem>>, vector<8x128xf32>,
    } else {
    }
    %c0_i32_2 = arith.constant 0 : i32
    %10 = arith.cmpi sgt, %arg1, %c0_i32_2 : i32
    %11 = arith.extui %10 : i1 to i32
    %c0_i32_3 = arith.constant 0 : i32
    %12 = arith.cmpi ne, %11, %c0_i32_3 : i32
    scf.if %12 {
      %c0_6 = arith.constant 0 : index
      %c0_7 = arith.constant 0 : index
      %16 = vector.load %arg5[%c0_6, %c0_7] : memref<8x128xf32, #tpu.memory_space<vmem>>, vector<8x128xf32>
      %17 = arith.addf %16, %4 : vector<8x128xf32>
      %c0_8 = arith.constant 0 : index
      %c0_9 = arith.constant 0 : index
      %18 = vector.load %arg5[%c0_8, %c0_9] : memref<8x128xf32, #tpu.memory_space<vmem>>, vector<8x128xf32>
      tpu.vector_store %arg5[%c0_8, %c0_9], %17 {strides = array<i32>} : memref<8x128xf32, #tpu.memory_space<vmem>>, vector<8x128xf32>,
      %c0_10 = arith.constant 0 : index
      %c0_11 = arith.constant 0 : index
      %19 = vector.load %arg6[%c0_10, %c0_11] : memref<8x128xf32, #tpu.memory_space<vmem>>, vector<8x128xf32>
      %20 = arith.maximumf %19, %6 : vector<8x128xf32>
      %c0_12 = arith.constant 0 : index
      %c0_13 = arith.constant 0 : index
      %21 = vector.load %arg6[%c0_12, %c0_13] : memref<8x128xf32, #tpu.memory_space<vmem>>, vector<8x128xf32>
      tpu.vector_store %arg6[%c0_12, %c0_13], %20 {strides = array<i32>} : memref<8x128xf32, #tpu.memory_space<vmem>>, vector<8x128xf32>,
    } else {
    }
    %c0_i32_4 = arith.constant 0 : i32
    %13 = arith.cmpi eq, %arg1, %c0_i32_4 : i32
    %14 = arith.extui %13 : i1 to i32
    %c0_i32_5 = arith.constant 0 : i32
    %15 = arith.cmpi ne, %14, %c0_i32_5 : i32
    scf.if %15 {
      %c0_6 = arith.constant 0 : index
      %c0_7 = arith.constant 0 : index
      %16 = vector.load %arg5[%c0_6, %c0_7] : memref<8x128xf32, #tpu.memory_space<vmem>>, vector<8x128xf32>
      %cst = arith.constant dense<0.000000e+00> : vector<8xf32>
      %17 = vector.multi_reduction <add>, %16, %cst [1] : vector<8x128xf32> to vector<8xf32>
      %18 = vector.shape_cast %17 : vector<8xf32> to vector<8x1xf32>
      %cst_8 = arith.constant 3.906250e-03 : f32
      %19 = vector.broadcast %cst_8 : f32 to vector<8x1xf32>
      %20 = arith.mulf %18, %19 : vector<8x1xf32>
      %c0_9 = arith.constant 0 : index
      %c0_10 = arith.constant 0 : index
      %21 = vector.load %arg3[%c0_9, %c0_10] : memref<8x1xf32, #tpu.memory_space<vmem>>, vector<8x1xf32>
      tpu.vector_store %arg3[%c0_9, %c0_10], %20 {strides = array<i32>} : memref<8x1xf32, #tpu.memory_space<vmem>>, vector<8x1xf32>,
      %c0_11 = arith.constant 0 : index
      %c0_12 = arith.constant 0 : index
      %22 = vector.load %arg6[%c0_11, %c0_12] : memref<8x128xf32, #tpu.memory_space<vmem>>, vector<8x128xf32>
      %cst_13 = arith.constant dense<0xFF800000> : vector<8xf32>
      %23 = vector.multi_reduction <maximumf>, %22, %cst_13 [1] : vector<8x128xf32> to vector<8xf32>
      %24 = vector.shape_cast %23 : vector<8xf32> to vector<8x1xf32>
      %c0_14 = arith.constant 0 : index
      %c0_15 = arith.constant 0 : index
      %25 = vector.load %arg4[%c0_14, %c0_15] : memref<8x1xf32, #tpu.memory_space<vmem>>, vector<8x1xf32>
      tpu.vector_store %arg4[%c0_14, %c0_15], %24 {strides = array<i32>} : memref<8x1xf32, #tpu.memory_space<vmem>>, vector<8x1xf32>,
    } else {
    }
    return
  }
  func.func @transform_0(%arg0: i32, %arg1: i32) -> (i32, i32) {
    %c0_i32 = arith.constant 0 : i32
    return %arg0, %arg1 : i32, i32
  }
  func.func @transform_1(%arg0: i32, %arg1: i32) -> (i32, i32) {
    %c0_i32 = arith.constant 0 : i32
    %c0_i32_0 = arith.constant 0 : i32
    return %arg0, %c0_i32 : i32, i32
  }
  func.func @transform_2(%arg0: i32, %arg1: i32) -> (i32, i32) {
    %c0_i32 = arith.constant 0 : i32
    %c0_i32_0 = arith.constant 0 : i32
    return %arg0, %c0_i32 : i32, i32
  }
}

</mosaic_0001>

<llo_original>
// kernel: tpu_custom_call.1
$region0: #{tpu_custom_call.1}
  #allocation0 [shape = 'u32[]', space=smem, size = 0x4, offset = 0x4, fixed_abs, tag = 'smem constant byte address 0x4 - core index']
  #allocation1 [shape = 'u32[144,128]{1,0:T(1,128)}', space=vmem, size = 0x12000, scoped, tag = 'internal scratch']
  #allocation2 [shape = 'f32[8,128]{1,0:T(8,128)}', space=vmem, size = 0x1000, scoped, tag = 'scratch operand']
  #allocation3 [shape = 'f32[8,128]{1,0:T(8,128)}', space=vmem, size = 0x1000, scoped, tag = 'scratch operand']
  %s0 = inlined_call_operand.hbm [shape: f32[8,256], index: 0, kind: input, shape index: {}]
  %s1 = inlined_call_operand.vmem [shape: f32[8,1], index: 1, kind: output, shape index: {0}]
  %s2 = inlined_call_operand.vmem [shape: f32[8,1], index: 2, kind: output, shape index: {1}]
  %3 = xla_tuple %s1, %s2
  %s4 = sld [smem:[#allocation0]]
  $region38: #{tpu_custom_call.1} parent=0
    _
  %s6 = ssub.s32 1, %s4
  %s7 = scalar_select 0, %s6, %s4
  $region1: #{tpu_custom_call.1} parent=0
    #allocation4 [shape = 'u8[8192]{0}', space=vmem, size = 0x2000, scoped, tag = 'input window, operand 0, single buffered']
    #allocation5 [shape = 's32[1]{0}', space=sflag, size = 0x4, scoped, tag = 'scoped memory for tpu_custom_call.1']
    %8 = vsyncpa [#allocation5], 0
    // Predicated region
    $region2: #{tpu_custom_call.1} parent=1 // pred_check
      _
    $region3: #{tpu_custom_call.1} parent=1 // pred_check_branch
      %10 = sbr.rel (0) target = $region5
    $region4: #{tpu_custom_call.1} parent=1 // pred_region
      %s12 = ssub.s32 256, 256
      %13 = vsyncadd [#allocation5], %s12
      %s15 = sshll.u32 [#allocation4], 4
      %s16 = int_to_ptr.vmem [resolvable:$true] %s15
      %18 = dma.hbm_to_vmem [thread:$0]  %s0, 256, %s16, [#allocation5]
    $region5: #{tpu_custom_call.1} parent=1 // pred_fallthru
      _
    // Predicated region
    $region6: #{tpu_custom_call.1} parent=1 // pred_check
      _
    $region7: #{tpu_custom_call.1} parent=1 // pred_check_branch
      %20 = sbr.rel (0) target = $region9
    $region8: #{tpu_custom_call.1} parent=1 // pred_region
      %21 = dma.done [#allocation5], 256
    $region9: #{tpu_custom_call.1} parent=1 // pred_fallthru
      _
    %v22 = vld [vmem:[#allocation4] sm:$0xff]
    %v23 = vld [vmem:[#allocation4 + $0x8] sm:$0xff]
    %v24 = vadd.f32 %v22, %v23
    %v25 = vmax.f32 %v22, %v23
    %p26 = scmp.eq.s32.totalorder 0, 0
    // Predicated region
    $region10: #{tpu_custom_call.1} parent=1 // pred_check
      %p27 = pneg %p26
    $region11: #{tpu_custom_call.1} parent=1 // pred_check_branch
      %29 = sbr.rel (%p27) target = $region13
    $region12: #{tpu_custom_call.1} parent=1 // pred_region
      %30 = vst [vmem:[#allocation2] sm:$0xff] %v24
      %31 = vst [vmem:[#allocation3] sm:$0xff] %v25
    $region13: #{tpu_custom_call.1} parent=1 // pred_fallthru
      _
    %p32 = scmp.gt.s32.totalorder 0, 0
    // Predicated region
    $region14: #{tpu_custom_call.1} parent=1 // pred_check
      %p33 = pneg %p32
    $region15: #{tpu_custom_call.1} parent=1 // pred_check_branch
      %35 = sbr.rel (%p33) target = $region17
    $region16: #{tpu_custom_call.1} parent=1 // pred_region
      %v36 = vld [vmem:[#allocation2] sm:$0xff]
      %v37 = vadd.f32 %v36, %v24
      %38 = vst [vmem:[#allocation2] sm:$0xff] %v37
      %v39 = vld [vmem:[#allocation3] sm:$0xff]
      %v40 = vmax.f32 %v39, %v25
      %41 = vst [vmem:[#allocation3] sm:$0xff] %v40
    $region17: #{tpu_custom_call.1} parent=1 // pred_fallthru
      _
    // Predicated region
    $region18: #{tpu_custom_call.1} parent=1 // pred_check
      %p42 = pneg %p26
    $region19: #{tpu_custom_call.1} parent=1 // pred_check_branch
      %44 = sbr.rel (%p42) target = $region21
    $region20: #{tpu_custom_call.1} parent=1 // pred_region
      %v45 = vld [vmem:[#allocation2] sm:$0xff]
      %46 = vadd.xlane.f32.xlu0 %v45
      %v47 = vpop.xlane.xlu0 %46
      %v48 = vmul.f32 %v47, 0.00390625
      %vm49 = vcmask 7168
      %50 = vst.msk [vmem:[%s1] sm:$0xff] %vm49, %v48
      %v51 = vld [vmem:[#allocation3] sm:$0xff]
      %52 = vmax.xlane.f32.xlu0 %v51
      %v53 = vpop.xlane.xlu0 %52
      %54 = vst.msk [vmem:[%s2] sm:$0xff] %vm49, %v53
    $region21: #{tpu_custom_call.1} parent=1 // pred_fallthru
      _
    // Predicated region
    $region22: #{tpu_custom_call.1} parent=1 // pred_check
      _
    $region23: #{tpu_custom_call.1} parent=1 // pred_check_branch
      %56 = sbr.rel (0) target = $region25
    $region24: #{tpu_custom_call.1} parent=1 // pred_region
      _
    $region25: #{tpu_custom_call.1} parent=1 // pred_fallthru
      _
    // Predicated region
    $region26: #{tpu_custom_call.1} parent=1 // pred_check
      _
    $region27: #{tpu_custom_call.1} parent=1 // pred_check_branch
      %58 = sbr.rel (0) target = $region29
    $region28: #{tpu_custom_call.1} parent=1 // pred_region
      _
    $region29: #{tpu_custom_call.1} parent=1 // pred_fallthru
      _
    // Predicated region
    $region30: #{tpu_custom_call.1} parent=1 // pred_check
      _
    $region31: #{tpu_custom_call.1} parent=1 // pred_check_branch
      %60 = sbr.rel (0) target = $region33
    $region32: #{tpu_custom_call.1} parent=1 // pred_region
      _
    $region33: #{tpu_custom_call.1} parent=1 // pred_fallthru
      _
    // Predicated region
    $region34: #{tpu_custom_call.1} parent=1 // pred_check
      _
    $region35: #{tpu_custom_call.1} parent=1 // pred_check_branch
      %62 = sbr.rel (0) target = $region37
    $region36: #{tpu_custom_call.1} parent=1 // pred_region
      _
    $region37: #{tpu_custom_call.1} parent=1 // pred_fallthru
      _
    %63 = vsyncpa [#allocation5], 1

</llo_original>
